<compile_context>
chip_gen: v7x
topology: tpu7x:2x2x1
jax: 0.10.0
libtpu: 0.0.40
codegen_flags: <defaults>
</compile_context>

<pallas_src>
import jax
import jax.numpy as jnp
from jax.experimental import pallas as pl
from jax.experimental.pallas import tpu as pltpu


def _round_up(n: int, m: int) -> int:
    return ((n + m - 1) // m) * m


def _fused_linear_kernel(x_ref, w_ref, o_ref):
    # Single MXU matmul with f32 accumulation. Output stays in the unpadded
    # 10-wide block (masked vst), which is cheap relative to the HBM DMA bytes.
    o_ref[...] = jnp.dot(
        x_ref[...], w_ref[...], preferred_element_type=jnp.float32
    ).astype(o_ref.dtype)


def my_model_forward(x, w1, w2, w3, w4, *, block_b: int = 8192,
                     min_kernel_rows: int = 1024):
    """Forward pass of MyModel.

    x:   [B, 10] float32
    w_i: [10, 10] float32, PyTorch layout (out_features, in_features)
    Returns [B, 10] float32 equal to (((x @ w1.T) @ w2.T) @ w3.T) @ w4.T.
    """
    B, D = x.shape

    # Fold the bias-free linear chain into one effective weight, pre-transposed
    # to [in, out] so the kernel needs no transpose:
    #   y = x @ w1.T @ w2.T @ w3.T @ w4.T = x @ (w4 @ w3 @ w2 @ w1).T
    w_eff_t = (w4 @ w3 @ w2 @ w1).T  # [D, D]

    if B < min_kernel_rows:
        # Tiny batch: launch / pipeline overhead dwarfs the ~200 FLOPs per row;
        # a plain XLA dot is strictly faster here.
        return x @ w_eff_t

    # Row tile: multiple of 8 (sublane), capped at block_b, and capped at
    # ceil(B/2) so the grid has >= 2 "parallel" steps (both v7x TCs participate).
    half = _round_up(pl.cdiv(B, 2), 8)
    tb = max(8, min(block_b, half))
    grid = (pl.cdiv(B, tb),)  # partial boundary block is handled by Pallas

    return pl.pallas_call(
        _fused_linear_kernel,
        out_shape=jax.ShapeDtypeStruct((B, D), x.dtype),
        grid=grid,
        in_specs=[
            pl.BlockSpec((tb, D), lambda i: (i, 0)),  # unpadded batch tile of x
            pl.BlockSpec((D, D), lambda i: (0, 0)),   # full folded weight, resident
        ],
        out_specs=pl.BlockSpec((tb, D), lambda i: (i, 0)),
        compiler_params=pltpu.CompilerParams(
            dimension_semantics=("parallel",)
        ),
    )(x, w_eff_t)


if __name__ == "__main__":
    key = jax.random.PRNGKey(0)
    kx1, kx2, kx3, k1, k2, k3, k4 = jax.random.split(key, 7)

    D = 10  # matches nn.Linear(10, 10)

    # Deterministic PyTorch-like init: U(-1/sqrt(in), 1/sqrt(in)), shape [out, in].
    bound = 1.0 / jnp.sqrt(jnp.float32(D))
    init = lambda k: jax.random.uniform(k, (D, D), jnp.float32, -bound, bound)
    w1, w2, w3, w4 = init(k1), init(k2), init(k3), init(k4)

    def reference(x):
        h = x @ w1.T
        h = h @ w2.T
        h = h @ w3.T
        h = h @ w4.T
        return h

    # 1) Spec-sized tiny batch (takes the XLA fallback path by design).
    x_small = jax.random.normal(kx1, (8, D), dtype=jnp.float32)
    out_small = jax.block_until_ready(my_model_forward(x_small, w1, w2, w3, w4))
    assert out_small.shape == (8, D)
    assert jnp.allclose(out_small, reference(x_small), atol=1e-4, rtol=1e-4), \
        "mismatch vs reference (small batch)"

    # 2) Kernel path: grid of 2 parallel steps, tile divides the batch exactly.
    x_big = jax.random.normal(kx2, (2048, D), dtype=jnp.float32)
    out_big = jax.block_until_ready(my_model_forward(x_big, w1, w2, w3, w4))
    assert out_big.shape == (2048, D)
    assert jnp.allclose(out_big, reference(x_big), atol=1e-4, rtol=1e-4), \
        "mismatch vs reference (kernel path)"

    # 3) Kernel path with a partial boundary block (B not a multiple of the tile).
    x_odd = jax.random.normal(kx3, (1234, D), dtype=jnp.float32)
    out_odd = jax.block_until_ready(my_model_forward(x_odd, w1, w2, w3, w4))
    assert out_odd.shape == (1234, D)
    assert jnp.allclose(out_odd, reference(x_odd), atol=1e-4, rtol=1e-4), \
        "mismatch vs reference (partial block)"

    print("KERNEL_OK")
</pallas_src>

<mosaic_0001>
module attributes {stable_mosaic.version = 11 : i64} {
  func.func @_fused_linear_kernel(%arg0: i32, %arg1: memref<1024x10xf32, #tpu.memory_space<vmem>>, %arg2: memref<10x10xf32, #tpu.memory_space<vmem>>, %arg3: memref<1024x10xf32, #tpu.memory_space<vmem>>) attributes {dimension_semantics = [#tpu.dimension_semantics<parallel>], iteration_bounds = array<i64: 2>, scalar_prefetch = 0 : i64, scratch_operands = 0 : i64, tpu.core_type = #tpu.core_type<tc>, window_params = [{transform_indices = @transform_0, window_bounds = array<i64: 1024, 10>}, {pipeline_mode = #tpu.pipeline_mode<synchronous>, transform_indices = @transform_1, window_bounds = array<i64: 10, 10>}, {transform_indices = @transform_2, window_bounds = array<i64: 1024, 10>}]} {
    %c0 = arith.constant 0 : index
    %c0_0 = arith.constant 0 : index
    %0 = vector.load %arg1[%c0, %c0_0] : memref<1024x10xf32, #tpu.memory_space<vmem>>, vector<1024x10xf32>
    %c0_1 = arith.constant 0 : index
    %c0_2 = arith.constant 0 : index
    %1 = vector.load %arg2[%c0_1, %c0_2] : memref<10x10xf32, #tpu.memory_space<vmem>>, vector<10x10xf32>
    %cst = arith.constant dense<0.000000e+00> : vector<1024x10xf32>
    %2 = tpu.matmul %0, %1, %cst {dimension_numbers = #tpu.dot_dimension_numbers<[1], [0], [0], [1], [0, 0, 1, 1], [], []>} : vector<1024x10xf32>, vector<10x10xf32>, vector<1024x10xf32> -> vector<1024x10xf32>
    %c0_3 = arith.constant 0 : index
    %c0_4 = arith.constant 0 : index
    %3 = vector.load %arg3[%c0_3, %c0_4] : memref<1024x10xf32, #tpu.memory_space<vmem>>, vector<1024x10xf32>
    tpu.vector_store %arg3[%c0_3, %c0_4], %2 {strides = array<i32>} : memref<1024x10xf32, #tpu.memory_space<vmem>>, vector<1024x10xf32>,
    return
  }
  func.func @transform_0(%arg0: i32) -> (i32, i32) {
    %c0_i32 = arith.constant 0 : i32
    %c0_i32_0 = arith.constant 0 : i32
    return %arg0, %c0_i32 : i32, i32
  }
  func.func @transform_1(%arg0: i32) -> (i32, i32) {
    %c0_i32 = arith.constant 0 : i32
    %c0_i32_0 = arith.constant 0 : i32
    %c0_i32_1 = arith.constant 0 : i32
    return %c0_i32, %c0_i32_0 : i32, i32
  }
  func.func @transform_2(%arg0: i32) -> (i32, i32) {
    %c0_i32 = arith.constant 0 : i32
    %c0_i32_0 = arith.constant 0 : i32
    return %arg0, %c0_i32 : i32, i32
  }
}

</mosaic_0001>

<llo_original>
// kernel: tpu_custom_call.1
$region0: #{tpu_custom_call.1}
  #allocation0 [shape = 'u32[]', space=smem, size = 0x4, offset = 0x4, fixed_abs, tag = 'smem constant byte address 0x4 - core index']
  #allocation1 [shape = 'u32[144,128]{1,0:T(1,128)}', space=vmem, size = 0x12000, scoped, tag = 'internal scratch']
  %s0 = inlined_call_operand.vmem [shape: f32[2048,10], index: 0, kind: input, shape index: {}]
  %s1 = inlined_call_operand.vmem [shape: f32[10,10], index: 1, kind: input, shape index: {}]
  %s2 = inlined_call_operand.vmem [shape: f32[2048,10], index: 2, kind: output, shape index: {}]
  %s3 = sld [smem:[#allocation0]]
  $region41: #{tpu_custom_call.1} parent=0
    _
  %s5 = ssub.s32 1, %s3
  %s6 = scalar_select 0, %s5, %s3
  loop: start=0, step=1, limit=4
  $region2: #{tpu_custom_call.1} parent=0 // loop_pre_header
    _
  $region3: #{tpu_custom_call.1} parent=0 // loop_header
    %s8 = sphi 0, %s12
    %p9 = scmp.ge.s32.totalorder %s8, 4
    %s18 = sphi 0, %s20
    %s21 = sphi 0, %s18
    %s22 = sphi 0, %s21
    %s38 = sphi 0, %s22
    %s42 = sphi 0, %s42
    %s44 = sphi 0, %s42
    %s45 = sphi 0, %s44
    %s59 = sphi 0, %s45
    %s65 = sphi 0, %s67
    %s68 = sphi 0, %s65
    %s69 = sphi 0, %s68
    %s85 = sphi 0, %s69
  $region4: #{tpu_custom_call.1} parent=0 // loop_header_branch
    %11 = sbr.rel (%p9) target = $region8
  $region5: #{tpu_custom_call.1} parent=0 // loop_body
    %s13 = ssub.s32 %s8, 1
    %s14 = ssub.s32 %s8, 2
    %s15 = sadd.s32 %s8, 1
    %s16 = ssub.s32 %s8, %s15
    %p17 = scmp.eq.s32.totalorder %s16, 0
    %s19 = sadd.s32 %s18, 1
    %s20 = scalar_select %p17, %s18, %s19
    %p23 = pneg %p17
    %p24 = scmp.eq.s32.totalorder %s8, 1
    %p25 = por %p23, %p24
    %p26 = scmp.ne.s32.totalorder %s18, %s21
    %p27 = scmp.eq.s32.totalorder %s8, 0
    %p28 = por %p26, %p27
    %p29 = scmp.ne.s32.totalorder %s18, %s21
    %p30 = scmp.eq.s32.totalorder %s13, 1
    %p31 = por %p29, %p30
    %p32 = scmp.ne.s32.totalorder %s21, %s22
    %p33 = scmp.eq.s32.totalorder %s13, 0
    %p34 = por %p32, %p33
    %p35 = scmp.ne.s32.totalorder %s21, %s22
    %p36 = scmp.eq.s32.totalorder %s14, 1
    %p37 = por %p35, %p36
    %p39 = scmp.ne.s32.totalorder %s22, %s38
    %p40 = scmp.eq.s32.totalorder %s14, 0
    %p41 = por %p39, %p40
    %s43 = sadd.s32 %s42, 1
    %p46 = scmp.eq.s32.totalorder %s8, 1
    %p47 = scmp.ne.s32.totalorder %s42, %s44
    %p48 = scmp.eq.s32.totalorder %s8, 0
    %p49 = por %p47, %p48
    %p50 = scmp.ne.s32.totalorder %s42, %s44
    %p51 = scmp.eq.s32.totalorder %s13, 1
    %p52 = por %p50, %p51
    %p53 = scmp.ne.s32.totalorder %s44, %s45
    %p54 = scmp.eq.s32.totalorder %s13, 0
    %p55 = por %p53, %p54
    %p56 = scmp.ne.s32.totalorder %s44, %s45
    %p57 = scmp.eq.s32.totalorder %s14, 1
    %p58 = por %p56, %p57
    %p60 = scmp.ne.s32.totalorder %s45, %s59
    %p61 = scmp.eq.s32.totalorder %s14, 0
    %p62 = por %p60, %p61
    %s63 = ssub.s32 %s8, %s15
    %p64 = scmp.eq.s32.totalorder %s63, 0
    %s66 = sadd.s32 %s65, 1
    %s67 = scalar_select %p64, %s65, %s66
    %p70 = pneg %p64
    %p71 = scmp.eq.s32.totalorder %s8, 1
    %p72 = por %p70, %p71
    %p73 = scmp.ne.s32.totalorder %s65, %s68
    %p74 = scmp.eq.s32.totalorder %s8, 0
    %p75 = por %p73, %p74
    %p76 = scmp.ne.s32.totalorder %s65, %s68
    %p77 = scmp.eq.s32.totalorder %s13, 1
    %p78 = por %p76, %p77
    %p79 = scmp.ne.s32.totalorder %s68, %s69
    %p80 = scmp.eq.s32.totalorder %s13, 0
    %p81 = por %p79, %p80
    %p82 = scmp.ne.s32.totalorder %s68, %s69
    %p83 = scmp.eq.s32.totalorder %s14, 1
    %p84 = por %p82, %p83
    %p86 = scmp.ne.s32.totalorder %s69, %s85
    %p87 = scmp.eq.s32.totalorder %s14, 0
    %p88 = por %p86, %p87
    %p89 = scmp.le.s32.totalorder 1, %s8
    %p90 = scmp.lt.s32.totalorder %s8, 3
    %p91 = pnand %p89, %p90
    %p92 = pneg %p91
    // Predicated region
    $region9: #{tpu_custom_call.1} parent=5 // pred_check
      _
    $region10: #{tpu_custom_call.1} parent=5 // pred_check_branch
      %94 = sbr.rel (%p91) target = $region12
    $region11: #{tpu_custom_call.1} parent=5 // pred_region
      %s95 = ssub.s32 %s8, 1
      // Predicated region
      $region13: #{tpu_custom_call.1} parent=11 // pred_check
        %p96 = pneg %p55
      $region14: #{tpu_custom_call.1} parent=11 // pred_check_branch
        %98 = sbr.rel (%p96) target = $region16
      $region15: #{tpu_custom_call.1} parent=11 // pred_region
        _
      $region16: #{tpu_custom_call.1} parent=11 // pred_fallthru
        _
    $region12: #{tpu_custom_call.1} parent=5 // pred_fallthru
      _
    %p99 = scmp.lt.s32.totalorder %s8, 2
    // Predicated region
    $region17: #{tpu_custom_call.1} parent=5 // pred_check
      %p100 = pneg %p99
    $region18: #{tpu_custom_call.1} parent=5 // pred_check_branch
      %102 = sbr.rel (%p100) target = $region20
    $region19: #{tpu_custom_call.1} parent=5 // pred_region
      // Predicated region
      $region21: #{tpu_custom_call.1} parent=19 // pred_check
        %p103 = pneg %p28
      $region22: #{tpu_custom_call.1} parent=19 // pred_check_branch
        %105 = sbr.rel (%p103) target = $region24
      $region23: #{tpu_custom_call.1} parent=19 // pred_region
        %s106 = smul.u32 128, %s8
        %p107 = scmp.lt.s32.totalorder %s106, 255
        %s108 = scalar_select %p107, %s106, 255
        %s109 = smul.addr %s108, 8
        %s110 = scalar_lea.vmem %s0, %s109
        %s111 = smul.u32 128, %s8
      $region24: #{tpu_custom_call.1} parent=19 // pred_fallthru
        _
    $region20: #{tpu_custom_call.1} parent=5 // pred_fallthru
      _
    %p112 = scmp.le.s32.totalorder 1, %s8
    %p113 = scmp.lt.s32.totalorder %s8, 3
    %p114 = pnand %p112, %p113
    %p115 = pneg %p114
    // Predicated region
    $region25: #{tpu_custom_call.1} parent=5 // pred_check
      _
    $region26: #{tpu_custom_call.1} parent=5 // pred_check_branch
      %117 = sbr.rel (%p114) target = $region28
    $region27: #{tpu_custom_call.1} parent=5 // pred_region
      %s118 = ssub.s32 %s8, 1
      %s119 = smul.u32 128, %s13
      %p120 = scmp.lt.s32.totalorder %s119, 255
      %s121 = scalar_select %p120, %s119, 255
      %s122 = smul.addr %s121, 8
      %s123 = scalar_lea.vmem %s0, %s122
      %p124 = pneg %p34
      %p125 = pneg %p31
      %p126 = pneg %p55
      %p127 = pneg %p52
      %p128 = pneg %p81
      %p129 = pneg %p78
      %s130 = smul.u32 128, %s13
      %p131 = scmp.lt.s32.totalorder %s130, 255
      %s132 = scalar_select %p131, %s130, 255
      %s133 = smul.addr %s132, 8
      %s134 = scalar_lea.vmem %s2, %s133
      %s135 = smul.u32 128, %s13
      %p136 = scmp.lt.s32.totalorder %s135, 255
      %s137 = scalar_select %p136, %s135, 255
      %s138 = smul.addr %s137, 8
      %s139 = scalar_lea.vmem %s0, %s138
      %s140 = smul.u32 128, %s13
      %s141 = smul.u32 128, %s13
      %p142 = scmp.lt.s32.totalorder %s141, 255
      %s143 = scalar_select %p142, %s141, 255
      %s144 = smul.addr %s143, 8
      %s145 = scalar_lea.vmem %s2, %s144
      %s146 = smul.u32 128, %s13
      %v147 = vld [vmem:[%s139] sm:$0xff]
      %v148 = vld [vmem:[%s139 + $0x8] sm:$0xff]
      %v149 = vld [vmem:[%s139 + $0x10] sm:$0xff]
      %v150 = vld [vmem:[%s139 + $0x18] sm:$0xff]
      %v151 = vld [vmem:[%s139 + $0x20] sm:$0xff]
      %v152 = vld [vmem:[%s139 + $0x28] sm:$0xff]
      %v153 = vld [vmem:[%s139 + $0x30] sm:$0xff]
      %v154 = vld [vmem:[%s139 + $0x38] sm:$0xff]
      %v155 = vld [vmem:[%s139 + $0x40] sm:$0xff]
      %v156 = vld [vmem:[%s139 + $0x48] sm:$0xff]
      %v157 = vld [vmem:[%s139 + $0x50] sm:$0xff]
      %v158 = vld [vmem:[%s139 + $0x58] sm:$0xff]
      %v159 = vld [vmem:[%s139 + $0x60] sm:$0xff]
      %v160 = vld [vmem:[%s139 + $0x68] sm:$0xff]
      %v161 = vld [vmem:[%s139 + $0x70] sm:$0xff]
      %v162 = vld [vmem:[%s139 + $0x78] sm:$0xff]
      %v163 = vld [vmem:[%s139 + $0x80] sm:$0xff]
      %v164 = vld [vmem:[%s139 + $0x88] sm:$0xff]
      %v165 = vld [vmem:[%s139 + $0x90] sm:$0xff]
      %v166 = vld [vmem:[%s139 + $0x98] sm:$0xff]
      %v167 = vld [vmem:[%s139 + $0xa0] sm:$0xff]
      %v168 = vld [vmem:[%s139 + $0xa8] sm:$0xff]
      %v169 = vld [vmem:[%s139 + $0xb0] sm:$0xff]
      %v170 = vld [vmem:[%s139 + $0xb8] sm:$0xff]
      %v171 = vld [vmem:[%s139 + $0xc0] sm:$0xff]
      %v172 = vld [vmem:[%s139 + $0xc8] sm:$0xff]
      %v173 = vld [vmem:[%s139 + $0xd0] sm:$0xff]
      %v174 = vld [vmem:[%s139 + $0xd8] sm:$0xff]
      %v175 = vld [vmem:[%s139 + $0xe0] sm:$0xff]
      %v176 = vld [vmem:[%s139 + $0xe8] sm:$0xff]
      %v177 = vld [vmem:[%s139 + $0xf0] sm:$0xff]
      %v178 = vld [vmem:[%s139 + $0xf8] sm:$0xff]
      %v179 = vld [vmem:[%s139 + $0x100] sm:$0xff]
      %v180 = vld [vmem:[%s139 + $0x108] sm:$0xff]
      %v181 = vld [vmem:[%s139 + $0x110] sm:$0xff]
      %v182 = vld [vmem:[%s139 + $0x118] sm:$0xff]
      %v183 = vld [vmem:[%s139 + $0x120] sm:$0xff]
      %v184 = vld [vmem:[%s139 + $0x128] sm:$0xff]
      %v185 = vld [vmem:[%s139 + $0x130] sm:$0xff]
      %v186 = vld [vmem:[%s139 + $0x138] sm:$0xff]
      %v187 = vld [vmem:[%s139 + $0x140] sm:$0xff]
      %v188 = vld [vmem:[%s139 + $0x148] sm:$0xff]
      %v189 = vld [vmem:[%s139 + $0x150] sm:$0xff]
      %v190 = vld [vmem:[%s139 + $0x158] sm:$0xff]
      %v191 = vld [vmem:[%s139 + $0x160] sm:$0xff]
      %v192 = vld [vmem:[%s139 + $0x168] sm:$0xff]
      %v193 = vld [vmem:[%s139 + $0x170] sm:$0xff]
      %v194 = vld [vmem:[%s139 + $0x178] sm:$0xff]
      %v195 = vld [vmem:[%s139 + $0x180] sm:$0xff]
      %v196 = vld [vmem:[%s139 + $0x188] sm:$0xff]
      %v197 = vld [vmem:[%s139 + $0x190] sm:$0xff]
      %v198 = vld [vmem:[%s139 + $0x198] sm:$0xff]
      %v199 = vld [vmem:[%s139 + $0x1a0] sm:$0xff]
      %v200 = vld [vmem:[%s139 + $0x1a8] sm:$0xff]
      %v201 = vld [vmem:[%s139 + $0x1b0] sm:$0xff]
      %v202 = vld [vmem:[%s139 + $0x1b8] sm:$0xff]
      %v203 = vld [vmem:[%s139 + $0x1c0] sm:$0xff]
      %v204 = vld [vmem:[%s139 + $0x1c8] sm:$0xff]
      %v205 = vld [vmem:[%s139 + $0x1d0] sm:$0xff]
      %v206 = vld [vmem:[%s139 + $0x1d8] sm:$0xff]
      %v207 = vld [vmem:[%s139 + $0x1e0] sm:$0xff]
      %v208 = vld [vmem:[%s139 + $0x1e8] sm:$0xff]
      %v209 = vld [vmem:[%s139 + $0x1f0] sm:$0xff]
      %v210 = vld [vmem:[%s139 + $0x1f8] sm:$0xff]
      %v211 = vld [vmem:[%s139 + $0x200] sm:$0xff]
      %v212 = vld [vmem:[%s139 + $0x208] sm:$0xff]
      %v213 = vld [vmem:[%s139 + $0x210] sm:$0xff]
      %v214 = vld [vmem:[%s139 + $0x218] sm:$0xff]
      %v215 = vld [vmem:[%s139 + $0x220] sm:$0xff]
      %v216 = vld [vmem:[%s139 + $0x228] sm:$0xff]
      %v217 = vld [vmem:[%s139 + $0x230] sm:$0xff]
      %v218 = vld [vmem:[%s139 + $0x238] sm:$0xff]
      %v219 = vld [vmem:[%s139 + $0x240] sm:$0xff]
      %v220 = vld [vmem:[%s139 + $0x248] sm:$0xff]
      %v221 = vld [vmem:[%s139 + $0x250] sm:$0xff]
      %v222 = vld [vmem:[%s139 + $0x258] sm:$0xff]
      %v223 = vld [vmem:[%s139 + $0x260] sm:$0xff]
      %v224 = vld [vmem:[%s139 + $0x268] sm:$0xff]
      %v225 = vld [vmem:[%s139 + $0x270] sm:$0xff]
      %v226 = vld [vmem:[%s139 + $0x278] sm:$0xff]
      %v227 = vld [vmem:[%s139 + $0x280] sm:$0xff]
      %v228 = vld [vmem:[%s139 + $0x288] sm:$0xff]
      %v229 = vld [vmem:[%s139 + $0x290] sm:$0xff]
      %v230 = vld [vmem:[%s139 + $0x298] sm:$0xff]
      %v231 = vld [vmem:[%s139 + $0x2a0] sm:$0xff]
      %v232 = vld [vmem:[%s139 + $0x2a8] sm:$0xff]
      %v233 = vld [vmem:[%s139 + $0x2b0] sm:$0xff]
      %v234 = vld [vmem:[%s139 + $0x2b8] sm:$0xff]
      %v235 = vld [vmem:[%s139 + $0x2c0] sm:$0xff]
      %v236 = vld [vmem:[%s139 + $0x2c8] sm:$0xff]
      %v237 = vld [vmem:[%s139 + $0x2d0] sm:$0xff]
      %v238 = vld [vmem:[%s139 + $0x2d8] sm:$0xff]
      %v239 = vld [vmem:[%s139 + $0x2e0] sm:$0xff]
      %v240 = vld [vmem:[%s139 + $0x2e8] sm:$0xff]
      %v241 = vld [vmem:[%s139 + $0x2f0] sm:$0xff]
      %v242 = vld [vmem:[%s139 + $0x2f8] sm:$0xff]
      %v243 = vld [vmem:[%s139 + $0x300] sm:$0xff]
      %v244 = vld [vmem:[%s139 + $0x308] sm:$0xff]
      %v245 = vld [vmem:[%s139 + $0x310] sm:$0xff]
      %v246 = vld [vmem:[%s139 + $0x318] sm:$0xff]
      %v247 = vld [vmem:[%s139 + $0x320] sm:$0xff]
      %v248 = vld [vmem:[%s139 + $0x328] sm:$0xff]
      %v249 = vld [vmem:[%s139 + $0x330] sm:$0xff]
      %v250 = vld [vmem:[%s139 + $0x338] sm:$0xff]
      %v251 = vld [vmem:[%s139 + $0x340] sm:$0xff]
      %v252 = vld [vmem:[%s139 + $0x348] sm:$0xff]
      %v253 = vld [vmem:[%s139 + $0x350] sm:$0xff]
      %v254 = vld [vmem:[%s139 + $0x358] sm:$0xff]
      %v255 = vld [vmem:[%s139 + $0x360] sm:$0xff]
      %v256 = vld [vmem:[%s139 + $0x368] sm:$0xff]
      %v257 = vld [vmem:[%s139 + $0x370] sm:$0xff]
      %v258 = vld [vmem:[%s139 + $0x378] sm:$0xff]
      %v259 = vld [vmem:[%s139 + $0x380] sm:$0xff]
      %v260 = vld [vmem:[%s139 + $0x388] sm:$0xff]
      %v261 = vld [vmem:[%s139 + $0x390] sm:$0xff]
      %v262 = vld [vmem:[%s139 + $0x398] sm:$0xff]
      %v263 = vld [vmem:[%s139 + $0x3a0] sm:$0xff]
      %v264 = vld [vmem:[%s139 + $0x3a8] sm:$0xff]
      %v265 = vld [vmem:[%s139 + $0x3b0] sm:$0xff]
      %v266 = vld [vmem:[%s139 + $0x3b8] sm:$0xff]
      %v267 = vld [vmem:[%s139 + $0x3c0] sm:$0xff]
      %v268 = vld [vmem:[%s139 + $0x3c8] sm:$0xff]
      %v269 = vld [vmem:[%s139 + $0x3d0] sm:$0xff]
      %v270 = vld [vmem:[%s139 + $0x3d8] sm:$0xff]
      %v271 = vld [vmem:[%s139 + $0x3e0] sm:$0xff]
      %v272 = vld [vmem:[%s139 + $0x3e8] sm:$0xff]
      %v273 = vld [vmem:[%s139 + $0x3f0] sm:$0xff]
      %v274 = vld [vmem:[%s139 + $0x3f8] sm:$0xff]
      %v275 = vld [vmem:[%s1] sm:$0xff]
      %v276 = vld [vmem:[%s1 + $0x8] sm:$0x3]
      %vm277 = vcmask 80896
      %v279 = vsel %vm277, %v147, 0
      %v282 = vsel %vm277, %v148, 0
      %v285 = vsel %vm277, %v149, 0
      %v288 = vsel %vm277, %v150, 0
      %v291 = vsel %vm277, %v151, 0
      %v294 = vsel %vm277, %v152, 0
      %v297 = vsel %vm277, %v153, 0
      %v300 = vsel %vm277, %v154, 0
      %v303 = vsel %vm277, %v155, 0
      %v306 = vsel %vm277, %v156, 0
      %v309 = vsel %vm277, %v157, 0
      %v312 = vsel %vm277, %v158, 0
      %v315 = vsel %vm277, %v159, 0
      %v318 = vsel %vm277, %v160, 0
      %v321 = vsel %vm277, %v161, 0
      %v324 = vsel %vm277, %v162, 0
      %v327 = vsel %vm277, %v163, 0
      %v330 = vsel %vm277, %v164, 0
      %v333 = vsel %vm277, %v165, 0
      %v336 = vsel %vm277, %v166, 0
      %v339 = vsel %vm277, %v167, 0
      %v342 = vsel %vm277, %v168, 0
      %v345 = vsel %vm277, %v169, 0
      %v348 = vsel %vm277, %v170, 0
      %v351 = vsel %vm277, %v171, 0
      %v354 = vsel %vm277, %v172, 0
      %v357 = vsel %vm277, %v173, 0
      %v360 = vsel %vm277, %v174, 0
      %v363 = vsel %vm277, %v175, 0
      %v366 = vsel %vm277, %v176, 0
      %v369 = vsel %vm277, %v177, 0
      %v372 = vsel %vm277, %v178, 0
      %v375 = vsel %vm277, %v179, 0
      %v378 = vsel %vm277, %v180, 0
      %v381 = vsel %vm277, %v181, 0
      %v384 = vsel %vm277, %v182, 0
      %v387 = vsel %vm277, %v183, 0
      %v390 = vsel %vm277, %v184, 0
      %v393 = vsel %vm277, %v185, 0
      %v396 = vsel %vm277, %v186, 0
      %v399 = vsel %vm277, %v187, 0
      %v402 = vsel %vm277, %v188, 0
      %v405 = vsel %vm277, %v189, 0
      %v408 = vsel %vm277, %v190, 0
      %v411 = vsel %vm277, %v191, 0
      %v414 = vsel %vm277, %v192, 0
      %v417 = vsel %vm277, %v193, 0
      %v420 = vsel %vm277, %v194, 0
      %v423 = vsel %vm277, %v195, 0
      %v426 = vsel %vm277, %v196, 0
      %v429 = vsel %vm277, %v197, 0
      %v432 = vsel %vm277, %v198, 0
      %v435 = vsel %vm277, %v199, 0
      %v438 = vsel %vm277, %v200, 0
      %v441 = vsel %vm277, %v201, 0
      %v444 = vsel %vm277, %v202, 0
      %v447 = vsel %vm277, %v203, 0
      %v450 = vsel %vm277, %v204, 0
      %v453 = vsel %vm277, %v205, 0
      %v456 = vsel %vm277, %v206, 0
      %v459 = vsel %vm277, %v207, 0
      %v462 = vsel %vm277, %v208, 0
      %v465 = vsel %vm277, %v209, 0
      %v468 = vsel %vm277, %v210, 0
      %v471 = vsel %vm277, %v211, 0
      %v474 = vsel %vm277, %v212, 0
      %v477 = vsel %vm277, %v213, 0
      %v480 = vsel %vm277, %v214, 0
      %v483 = vsel %vm277, %v215, 0
      %v486 = vsel %vm277, %v216, 0
      %v489 = vsel %vm277, %v217, 0
      %v492 = vsel %vm277, %v218, 0
      %v495 = vsel %vm277, %v219, 0
      %v498 = vsel %vm277, %v220, 0
      %v501 = vsel %vm277, %v221, 0
      %v504 = vsel %vm277, %v222, 0
      %v507 = vsel %vm277, %v223, 0
      %v510 = vsel %vm277, %v224, 0
      %v513 = vsel %vm277, %v225, 0
      %v516 = vsel %vm277, %v226, 0
      %v519 = vsel %vm277, %v227, 0
      %v522 = vsel %vm277, %v228, 0
      %v525 = vsel %vm277, %v229, 0
      %v528 = vsel %vm277, %v230, 0
      %v531 = vsel %vm277, %v231, 0
      %v534 = vsel %vm277, %v232, 0
      %v537 = vsel %vm277, %v233, 0
      %v540 = vsel %vm277, %v234, 0
      %v543 = vsel %vm277, %v235, 0
      %v546 = vsel %vm277, %v236, 0
      %v549 = vsel %vm277, %v237, 0
      %v552 = vsel %vm277, %v238, 0
      %v555 = vsel %vm277, %v239, 0
      %v558 = vsel %vm277, %v240, 0
      %v561 = vsel %vm277, %v241, 0
      %v564 = vsel %vm277, %v242, 0
      %v567 = vsel %vm277, %v243, 0
      %v570 = vsel %vm277, %v244, 0
      %v573 = vsel %vm277, %v245, 0
      %v576 = vsel %vm277, %v246, 0
      %v579 = vsel %vm277, %v247, 0
      %v582 = vsel %vm277, %v248, 0
      %v585 = vsel %vm277, %v249, 0
      %v588 = vsel %vm277, %v250, 0
      %v591 = vsel %vm277, %v251, 0
      %v594 = vsel %vm277, %v252, 0
      %v597 = vsel %vm277, %v253, 0
      %v600 = vsel %vm277, %v254, 0
      %v603 = vsel %vm277, %v255, 0
      %v606 = vsel %vm277, %v256, 0
      %v609 = vsel %vm277, %v257, 0
      %v612 = vsel %vm277, %v258, 0
      %v615 = vsel %vm277, %v259, 0
      %v618 = vsel %vm277, %v260, 0
      %v621 = vsel %vm277, %v261, 0
      %v624 = vsel %vm277, %v262, 0
      %v627 = vsel %vm277, %v263, 0
      %v630 = vsel %vm277, %v264, 0
      %v633 = vsel %vm277, %v265, 0
      %v636 = vsel %vm277, %v266, 0
      %v639 = vsel %vm277, %v267, 0
      %v642 = vsel %vm277, %v268, 0
      %v645 = vsel %vm277, %v269, 0
      %v648 = vsel %vm277, %v270, 0
      %v651 = vsel %vm277, %v271, 0
      %v654 = vsel %vm277, %v272, 0
      %v657 = vsel %vm277, %v273, 0
      %v660 = vsel %vm277, %v274, 0
      %vm662 = vcmask 1041408
      %v664 = vsel %vm662, %v276, 0
      %666 = vmatprep.subr.mxu0 0.0
      %667 = vmatpush1.msra.mxu0 %v275
      %668 = vmatprep.subr.mxu0 0.0
      %669 = vmatpush1.msra.mxu0 %v664
      %670 = vmatprep.subr.mxu0 0.0
      %671 = vmatpush1.msra.mxu0 0.0
      %672 = vmatprep.subr.mxu0 0.0
      %673 = vmatpush1.msra.mxu0 0.0
      %674 = vmatprep.subr.mxu0 0.0
      %675 = vmatpush1.msra.mxu0 0.0
      %676 = vmatprep.subr.mxu0 0.0
      %677 = vmatpush1.msra.mxu0 0.0
      %678 = vmatprep.subr.mxu0 0.0
      %679 = vmatpush1.msra.mxu0 0.0
      %680 = vmatprep.subr.mxu0 0.0
      %681 = vmatpush1.msra.mxu0 0.0
      %682 = vmatprep.subr.mxu0 0.0
      %683 = vmatpush1.msra.mxu0 0.0
      %684 = vmatprep.subr.mxu0 0.0
      %685 = vmatpush1.msra.mxu0 0.0
      %686 = vmatprep.subr.mxu0 0.0
      %687 = vmatpush1.msra.mxu0 0.0
      %688 = vmatprep.subr.mxu0 0.0
      %689 = vmatpush1.msra.mxu0 0.0
      %690 = vmatprep.subr.mxu0 0.0
      %691 = vmatpush1.msra.mxu0 0.0
      %692 = vmatprep.subr.mxu0 0.0
      %693 = vmatpush1.msra.mxu0 0.0
      %694 = vmatprep.subr.mxu0 0.0
      %695 = vmatpush1.msra.mxu0 0.0
      %696 = vmatprep.subr.mxu0 0.0
      %697 = vmatpush1.msra.mxu0 0.0
      %698 = vmatprep.subr.mxu0 0.0
      %699 = vmatpush1.msra.mxu0 0.0
      %700 = vmatprep.subr.mxu0 0.0
      %701 = vmatpush1.msra.mxu0 0.0
      %702 = vmatprep.subr.mxu0 0.0
      %703 = vmatpush1.msra.mxu0 0.0
      %704 = vmatprep.subr.mxu0 0.0
      %705 = vmatpush1.msra.mxu0 0.0
      %706 = vmatprep.subr.mxu0 0.0
      %707 = vmatpush1.msra.mxu0 0.0
      %708 = vmatprep.subr.mxu0 0.0
      %709 = vmatpush1.msra.mxu0 0.0
      %710 = vmatprep.subr.mxu0 0.0
      %711 = vmatpush1.msra.mxu0 0.0
      %712 = vmatprep.subr.mxu0 0.0
      %713 = vmatpush1.msra.mxu0 0.0
      %714 = vmatprep.subr.mxu0 0.0
      %715 = vmatpush1.msra.mxu0 0.0
      %716 = vmatprep.subr.mxu0 0.0
      %717 = vmatpush1.msra.mxu0 0.0
      %718 = vmatprep.subr.mxu0 0.0
      %719 = vmatpush1.msra.mxu0 0.0
      %720 = vmatprep.subr.mxu0 0.0
      %721 = vmatpush1.msra.mxu0 0.0
      %722 = vmatprep.subr.mxu0 0.0
      %723 = vmatpush1.msra.mxu0 0.0
      %724 = vmatprep.subr.mxu0 0.0
      %725 = vmatpush1.msra.mxu0 0.0
      %726 = vmatprep.subr.mxu0 0.0
      %727 = vmatpush1.msra.mxu0 0.0
      %728 = vmatprep.subr.mxu0 0.0
      %729 = vmatpush1.msra.mxu0 0.0
      %730 = vmatprep.mubr.f32.mxu0 0.0
      %731 = vmatmul.mubr.f32.gmra.mrb[0].mxu0 %v279
      %v732 = vpop.f32.mrb[0].mxu0
      %v733 = vadd.f32 0.0, %v732
      %v734 = vpop.f32.mrb[0].mxu0
      %735 = vmatprep.mubr.f32.mxu0 0.0
      %736 = vmatmul.mubr.f32.gmra.mrb[0].mxu0 %v282
      %v737 = vpop.f32.mrb[0].mxu0
      %v738 = vadd.f32 0.0, %v737
      %v739 = vpop.f32.mrb[0].mxu0
      %740 = vmatprep.mubr.f32.mxu0 0.0
      %741 = vmatmul.mubr.f32.gmra.mrb[0].mxu0 %v285
      %v742 = vpop.f32.mrb[0].mxu0
      %v743 = vadd.f32 0.0, %v742
      %v744 = vpop.f32.mrb[0].mxu0
      %745 = vmatprep.mubr.f32.mxu0 0.0
      %746 = vmatmul.mubr.f32.gmra.mrb[0].mxu0 %v288
      %v747 = vpop.f32.mrb[0].mxu0
      %v748 = vadd.f32 0.0, %v747
      %v749 = vpop.f32.mrb[0].mxu0
      %750 = vmatprep.mubr.f32.mxu0 0.0
      %751 = vmatmul.mubr.f32.gmra.mrb[0].mxu0 %v291
      %v752 = vpop.f32.mrb[0].mxu0
      %v753 = vadd.f32 0.0, %v752
      %v754 = vpop.f32.mrb[0].mxu0
      %755 = vmatprep.mubr.f32.mxu0 0.0
      %756 = vmatmul.mubr.f32.gmra.mrb[0].mxu0 %v294
      %v757 = vpop.f32.mrb[0].mxu0
      %v758 = vadd.f32 0.0, %v757
      %v759 = vpop.f32.mrb[0].mxu0
      %760 = vmatprep.mubr.f32.mxu0 0.0
      %761 = vmatmul.mubr.f32.gmra.mrb[0].mxu0 %v297
      %v762 = vpop.f32.mrb[0].mxu0
      %v763 = vadd.f32 0.0, %v762
      %v764 = vpop.f32.mrb[0].mxu0
      %765 = vmatprep.mubr.f32.mxu0 0.0
      %766 = vmatmul.mubr.f32.gmra.mrb[0].mxu0 %v300
      %v767 = vpop.f32.mrb[0].mxu0
      %v768 = vadd.f32 0.0, %v767
      %v769 = vpop.f32.mrb[0].mxu0
      %770 = vmatprep.mubr.f32.mxu0 0.0
      %771 = vmatmul.mubr.f32.gmra.mrb[0].mxu0 %v303
      %v772 = vpop.f32.mrb[0].mxu0
      %v773 = vadd.f32 0.0, %v772
      %v774 = vpop.f32.mrb[0].mxu0
      %775 = vmatprep.mubr.f32.mxu0 0.0
      %776 = vmatmul.mubr.f32.gmra.mrb[0].mxu0 %v306
      %v777 = vpop.f32.mrb[0].mxu0
      %v778 = vadd.f32 0.0, %v777
      %v779 = vpop.f32.mrb[0].mxu0
      %780 = vmatprep.mubr.f32.mxu0 0.0
      %781 = vmatmul.mubr.f32.gmra.mrb[0].mxu0 %v309
      %v782 = vpop.f32.mrb[0].mxu0
      %v783 = vadd.f32 0.0, %v782
      %v784 = vpop.f32.mrb[0].mxu0
      %785 = vmatprep.mubr.f32.mxu0 0.0
      %786 = vmatmul.mubr.f32.gmra.mrb[0].mxu0 %v312
      %v787 = vpop.f32.mrb[0].mxu0
      %v788 = vadd.f32 0.0, %v787
      %v789 = vpop.f32.mrb[0].mxu0
      %790 = vmatprep.mubr.f32.mxu0 0.0
      %791 = vmatmul.mubr.f32.gmra.mrb[0].mxu0 %v315
      %v792 = vpop.f32.mrb[0].mxu0
      %v793 = vadd.f32 0.0, %v792
      %v794 = vpop.f32.mrb[0].mxu0
      %795 = vmatprep.mubr.f32.mxu0 0.0
      %796 = vmatmul.mubr.f32.gmra.mrb[0].mxu0 %v318
      %v797 = vpop.f32.mrb[0].mxu0
      %v798 = vadd.f32 0.0, %v797
      %v799 = vpop.f32.mrb[0].mxu0
      %800 = vmatprep.mubr.f32.mxu0 0.0
      %801 = vmatmul.mubr.f32.gmra.mrb[0].mxu0 %v321
      %v802 = vpop.f32.mrb[0].mxu0
      %v803 = vadd.f32 0.0, %v802
      %v804 = vpop.f32.mrb[0].mxu0
      %805 = vmatprep.mubr.f32.mxu0 0.0
      %806 = vmatmul.mubr.f32.gmra.mrb[0].mxu0 %v324
      %v807 = vpop.f32.mrb[0].mxu0
      %v808 = vadd.f32 0.0, %v807
      %v809 = vpop.f32.mrb[0].mxu0
      %810 = vmatprep.mubr.f32.mxu0 0.0
      %811 = vmatmul.mubr.f32.gmra.mrb[0].mxu0 %v327
      %v812 = vpop.f32.mrb[0].mxu0
      %v813 = vadd.f32 0.0, %v812
      %v814 = vpop.f32.mrb[0].mxu0
      %815 = vmatprep.mubr.f32.mxu0 0.0
      %816 = vmatmul.mubr.f32.gmra.mrb[0].mxu0 %v330
      %v817 = vpop.f32.mrb[0].mxu0
      %v818 = vadd.f32 0.0, %v817
      %v819 = vpop.f32.mrb[0].mxu0
      %820 = vmatprep.mubr.f32.mxu0 0.0
      %821 = vmatmul.mubr.f32.gmra.mrb[0].mxu0 %v333
      %v822 = vpop.f32.mrb[0].mxu0
      %v823 = vadd.f32 0.0, %v822
      %v824 = vpop.f32.mrb[0].mxu0
      %825 = vmatprep.mubr.f32.mxu0 0.0
      %826 = vmatmul.mubr.f32.gmra.mrb[0].mxu0 %v336
      %v827 = vpop.f32.mrb[0].mxu0
      %v828 = vadd.f32 0.0, %v827
      %v829 = vpop.f32.mrb[0].mxu0
      %830 = vmatprep.mubr.f32.mxu0 0.0
      %831 = vmatmul.mubr.f32.gmra.mrb[0].mxu0 %v339
      %v832 = vpop.f32.mrb[0].mxu0
      %v833 = vadd.f32 0.0, %v832
      %v834 = vpop.f32.mrb[0].mxu0
      %835 = vmatprep.mubr.f32.mxu0 0.0
      %836 = vmatmul.mubr.f32.gmra.mrb[0].mxu0 %v342
      %v837 = vpop.f32.mrb[0].mxu0
      %v838 = vadd.f32 0.0, %v837
      %v839 = vpop.f32.mrb[0].mxu0
      %840 = vmatprep.mubr.f32.mxu0 0.0
      %841 = vmatmul.mubr.f32.gmra.mrb[0].mxu0 %v345
      %v842 = vpop.f32.mrb[0].mxu0
      %v843 = vadd.f32 0.0, %v842
      %v844 = vpop.f32.mrb[0].mxu0
      %845 = vmatprep.mubr.f32.mxu0 0.0
      %846 = vmatmul.mubr.f32.gmra.mrb[0].mxu0 %v348
      %v847 = vpop.f32.mrb[0].mxu0
      %v848 = vadd.f32 0.0, %v847
      %v849 = vpop.f32.mrb[0].mxu0
      %850 = vmatprep.mubr.f32.mxu0 0.0
      %851 = vmatmul.mubr.f32.gmra.mrb[0].mxu0 %v351
      %v852 = vpop.f32.mrb[0].mxu0
      %v853 = vadd.f32 0.0, %v852
      %v854 = vpop.f32.mrb[0].mxu0
      %855 = vmatprep.mubr.f32.mxu0 0.0
      %856 = vmatmul.mubr.f32.gmra.mrb[0].mxu0 %v354
      %v857 = vpop.f32.mrb[0].mxu0
      %v858 = vadd.f32 0.0, %v857
      %v859 = vpop.f32.mrb[0].mxu0
      %860 = vmatprep.mubr.f32.mxu0 0.0
      %861 = vmatmul.mubr.f32.gmra.mrb[0].mxu0 %v357
      %v862 = vpop.f32.mrb[0].mxu0
      %v863 = vadd.f32 0.0, %v862
      %v864 = vpop.f32.mrb[0].mxu0
      %865 = vmatprep.mubr.f32.mxu0 0.0
      %866 = vmatmul.mubr.f32.gmra.mrb[0].mxu0 %v360
      %v867 = vpop.f32.mrb[0].mxu0
      %v868 = vadd.f32 0.0, %v867
      %v869 = vpop.f32.mrb[0].mxu0
      %870 = vmatprep.mubr.f32.mxu0 0.0
      %871 = vmatmul.mubr.f32.gmra.mrb[0].mxu0 %v363
      %v872 = vpop.f32.mrb[0].mxu0
      %v873 = vadd.f32 0.0, %v872
      %v874 = vpop.f32.mrb[0].mxu0
      %875 = vmatprep.mubr.f32.mxu0 0.0
      %876 = vmatmul.mubr.f32.gmra.mrb[0].mxu0 %v366
      %v877 = vpop.f32.mrb[0].mxu0
      %v878 = vadd.f32 0.0, %v877
      %v879 = vpop.f32.mrb[0].mxu0
      %880 = vmatprep.mubr.f32.mxu0 0.0
      %881 = vmatmul.mubr.f32.gmra.mrb[0].mxu0 %v369
      %v882 = vpop.f32.mrb[0].mxu0
      %v883 = vadd.f32 0.0, %v882
      %v884 = vpop.f32.mrb[0].mxu0
      %885 = vmatprep.mubr.f32.mxu0 0.0
      %886 = vmatmul.mubr.f32.gmra.mrb[0].mxu0 %v372
      %v887 = vpop.f32.mrb[0].mxu0
      %v888 = vadd.f32 0.0, %v887
      %v889 = vpop.f32.mrb[0].mxu0
      %890 = vmatprep.mubr.f32.mxu0 0.0
      %891 = vmatmul.mubr.f32.gmra.mrb[0].mxu0 %v375
      %v892 = vpop.f32.mrb[0].mxu0
      %v893 = vadd.f32 0.0, %v892
      %v894 = vpop.f32.mrb[0].mxu0
      %895 = vmatprep.mubr.f32.mxu0 0.0
      %896 = vmatmul.mubr.f32.gmra.mrb[0].mxu0 %v378
      %v897 = vpop.f32.mrb[0].mxu0
      %v898 = vadd.f32 0.0, %v897
      %v899 = vpop.f32.mrb[0].mxu0
      %900 = vmatprep.mubr.f32.mxu0 0.0
      %901 = vmatmul.mubr.f32.gmra.mrb[0].mxu0 %v381
      %v902 = vpop.f32.mrb[0].mxu0
      %v903 = vadd.f32 0.0, %v902
      %v904 = vpop.f32.mrb[0].mxu0
      %905 = vmatprep.mubr.f32.mxu0 0.0
      %906 = vmatmul.mubr.f32.gmra.mrb[0].mxu0 %v384
      %v907 = vpop.f32.mrb[0].mxu0
      %v908 = vadd.f32 0.0, %v907
      %v909 = vpop.f32.mrb[0].mxu0
      %910 = vmatprep.mubr.f32.mxu0 0.0
      %911 = vmatmul.mubr.f32.gmra.mrb[0].mxu0 %v387
      %v912 = vpop.f32.mrb[0].mxu0
      %v913 = vadd.f32 0.0, %v912
      %v914 = vpop.f32.mrb[0].mxu0
      %915 = vmatprep.mubr.f32.mxu0 0.0
      %916 = vmatmul.mubr.f32.gmra.mrb[0].mxu0 %v390
      %v917 = vpop.f32.mrb[0].mxu0
      %v918 = vadd.f32 0.0, %v917
      %v919 = vpop.f32.mrb[0].mxu0
      %920 = vmatprep.mubr.f32.mxu0 0.0
      %921 = vmatmul.mubr.f32.gmra.mrb[0].mxu0 %v393
      %v922 = vpop.f32.mrb[0].mxu0
      %v923 = vadd.f32 0.0, %v922
      %v924 = vpop.f32.mrb[0].mxu0
      %925 = vmatprep.mubr.f32.mxu0 0.0
      %926 = vmatmul.mubr.f32.gmra.mrb[0].mxu0 %v396
      %v927 = vpop.f32.mrb[0].mxu0
      %v928 = vadd.f32 0.0, %v927
      %v929 = vpop.f32.mrb[0].mxu0
      %930 = vmatprep.mubr.f32.mxu0 0.0
      %931 = vmatmul.mubr.f32.gmra.mrb[0].mxu0 %v399
      %v932 = vpop.f32.mrb[0].mxu0
      %v933 = vadd.f32 0.0, %v932
      %v934 = vpop.f32.mrb[0].mxu0
      %935 = vmatprep.mubr.f32.mxu0 0.0
      %936 = vmatmul.mubr.f32.gmra.mrb[0].mxu0 %v402
      %v937 = vpop.f32.mrb[0].mxu0
      %v938 = vadd.f32 0.0, %v937
      %v939 = vpop.f32.mrb[0].mxu0
      %940 = vmatprep.mubr.f32.mxu0 0.0
      %941 = vmatmul.mubr.f32.gmra.mrb[0].mxu0 %v405
      %v942 = vpop.f32.mrb[0].mxu0
      %v943 = vadd.f32 0.0, %v942
      %v944 = vpop.f32.mrb[0].mxu0
      %945 = vmatprep.mubr.f32.mxu0 0.0
      %946 = vmatmul.mubr.f32.gmra.mrb[0].mxu0 %v408
      %v947 = vpop.f32.mrb[0].mxu0
      %v948 = vadd.f32 0.0, %v947
      %v949 = vpop.f32.mrb[0].mxu0
      %950 = vmatprep.mubr.f32.mxu0 0.0
      %951 = vmatmul.mubr.f32.gmra.mrb[0].mxu0 %v411
      %v952 = vpop.f32.mrb[0].mxu0
      %v953 = vadd.f32 0.0, %v952
      %v954 = vpop.f32.mrb[0].mxu0
      %955 = vmatprep.mubr.f32.mxu0 0.0
      %956 = vmatmul.mubr.f32.gmra.mrb[0].mxu0 %v414
      %v957 = vpop.f32.mrb[0].mxu0
      %v958 = vadd.f32 0.0, %v957
      %v959 = vpop.f32.mrb[0].mxu0
      %960 = vmatprep.mubr.f32.mxu0 0.0
      %961 = vmatmul.mubr.f32.gmra.mrb[0].mxu0 %v417
      %v962 = vpop.f32.mrb[0].mxu0
      %v963 = vadd.f32 0.0, %v962
      %v964 = vpop.f32.mrb[0].mxu0
      %965 = vmatprep.mubr.f32.mxu0 0.0
      %966 = vmatmul.mubr.f32.gmra.mrb[0].mxu0 %v420
      %v967 = vpop.f32.mrb[0].mxu0
      %v968 = vadd.f32 0.0, %v967
      %v969 = vpop.f32.mrb[0].mxu0
      %970 = vmatprep.mubr.f32.mxu0 0.0
      %971 = vmatmul.mubr.f32.gmra.mrb[0].mxu0 %v423
      %v972 = vpop.f32.mrb[0].mxu0
      %v973 = vadd.f32 0.0, %v972
      %v974 = vpop.f32.mrb[0].mxu0
      %975 = vmatprep.mubr.f32.mxu0 0.0
      %976 = vmatmul.mubr.f32.gmra.mrb[0].mxu0 %v426
      %v977 = vpop.f32.mrb[0].mxu0
      %v978 = vadd.f32 0.0, %v977
      %v979 = vpop.f32.mrb[0].mxu0
      %980 = vmatprep.mubr.f32.mxu0 0.0
      %981 = vmatmul.mubr.f32.gmra.mrb[0].mxu0 %v429
      %v982 = vpop.f32.mrb[0].mxu0
      %v983 = vadd.f32 0.0, %v982
      %v984 = vpop.f32.mrb[0].mxu0
      %985 = vmatprep.mubr.f32.mxu0 0.0
      %986 = vmatmul.mubr.f32.gmra.mrb[0].mxu0 %v432
      %v987 = vpop.f32.mrb[0].mxu0
      %v988 = vadd.f32 0.0, %v987
      %v989 = vpop.f32.mrb[0].mxu0
      %990 = vmatprep.mubr.f32.mxu0 0.0
      %991 = vmatmul.mubr.f32.gmra.mrb[0].mxu0 %v435
      %v992 = vpop.f32.mrb[0].mxu0
      %v993 = vadd.f32 0.0, %v992
      %v994 = vpop.f32.mrb[0].mxu0
      %995 = vmatprep.mubr.f32.mxu0 0.0
      %996 = vmatmul.mubr.f32.gmra.mrb[0].mxu0 %v438
      %v997 = vpop.f32.mrb[0].mxu0
      %v998 = vadd.f32 0.0, %v997
      %v999 = vpop.f32.mrb[0].mxu0
      %1000 = vmatprep.mubr.f32.mxu0 0.0
      %1001 = vmatmul.mubr.f32.gmra.mrb[0].mxu0 %v441
      %v1002 = vpop.f32.mrb[0].mxu0
      %v1003 = vadd.f32 0.0, %v1002
      %v1004 = vpop.f32.mrb[0].mxu0
      %1005 = vmatprep.mubr.f32.mxu0 0.0
      %1006 = vmatmul.mubr.f32.gmra.mrb[0].mxu0 %v444
      %v1007 = vpop.f32.mrb[0].mxu0
      %v1008 = vadd.f32 0.0, %v1007
      %v1009 = vpop.f32.mrb[0].mxu0
      %1010 = vmatprep.mubr.f32.mxu0 0.0
      %1011 = vmatmul.mubr.f32.gmra.mrb[0].mxu0 %v447
      %v1012 = vpop.f32.mrb[0].mxu0
      %v1013 = vadd.f32 0.0, %v1012
      %v1014 = vpop.f32.mrb[0].mxu0
      %1015 = vmatprep.mubr.f32.mxu0 0.0
      %1016 = vmatmul.mubr.f32.gmra.mrb[0].mxu0 %v450
      %v1017 = vpop.f32.mrb[0].mxu0
      %v1018 = vadd.f32 0.0, %v1017
      %v1019 = vpop.f32.mrb[0].mxu0
      %1020 = vmatprep.mubr.f32.mxu0 0.0
      %1021 = vmatmul.mubr.f32.gmra.mrb[0].mxu0 %v453
      %v1022 = vpop.f32.mrb[0].mxu0
      %v1023 = vadd.f32 0.0, %v1022
      %v1024 = vpop.f32.mrb[0].mxu0
      %1025 = vmatprep.mubr.f32.mxu0 0.0
      %1026 = vmatmul.mubr.f32.gmra.mrb[0].mxu0 %v456
      %v1027 = vpop.f32.mrb[0].mxu0
      %v1028 = vadd.f32 0.0, %v1027
      %v1029 = vpop.f32.mrb[0].mxu0
      %1030 = vmatprep.mubr.f32.mxu0 0.0
      %1031 = vmatmul.mubr.f32.gmra.mrb[0].mxu0 %v459
      %v1032 = vpop.f32.mrb[0].mxu0
      %v1033 = vadd.f32 0.0, %v1032
      %v1034 = vpop.f32.mrb[0].mxu0
      %1035 = vmatprep.mubr.f32.mxu0 0.0
      %1036 = vmatmul.mubr.f32.gmra.mrb[0].mxu0 %v462
      %v1037 = vpop.f32.mrb[0].mxu0
      %v1038 = vadd.f32 0.0, %v1037
      %v1039 = vpop.f32.mrb[0].mxu0
      %1040 = vmatprep.mubr.f32.mxu0 0.0
      %1041 = vmatmul.mubr.f32.gmra.mrb[0].mxu0 %v465
      %v1042 = vpop.f32.mrb[0].mxu0
      %v1043 = vadd.f32 0.0, %v1042
      %v1044 = vpop.f32.mrb[0].mxu0
      %1045 = vmatprep.mubr.f32.mxu0 0.0
      %1046 = vmatmul.mubr.f32.gmra.mrb[0].mxu0 %v468
      %v1047 = vpop.f32.mrb[0].mxu0
      %v1048 = vadd.f32 0.0, %v1047
      %v1049 = vpop.f32.mrb[0].mxu0
      %1050 = vmatprep.mubr.f32.mxu0 0.0
      %1051 = vmatmul.mubr.f32.gmra.mrb[0].mxu0 %v471
      %v1052 = vpop.f32.mrb[0].mxu0
      %v1053 = vadd.f32 0.0, %v1052
      %v1054 = vpop.f32.mrb[0].mxu0
      %1055 = vmatprep.mubr.f32.mxu0 0.0
      %1056 = vmatmul.mubr.f32.gmra.mrb[0].mxu0 %v474
      %v1057 = vpop.f32.mrb[0].mxu0
      %v1058 = vadd.f32 0.0, %v1057
      %v1059 = vpop.f32.mrb[0].mxu0
      %1060 = vmatprep.mubr.f32.mxu0 0.0
      %1061 = vmatmul.mubr.f32.gmra.mrb[0].mxu0 %v477
      %v1062 = vpop.f32.mrb[0].mxu0
      %v1063 = vadd.f32 0.0, %v1062
      %v1064 = vpop.f32.mrb[0].mxu0
      %1065 = vmatprep.mubr.f32.mxu0 0.0
      %1066 = vmatmul.mubr.f32.gmra.mrb[0].mxu0 %v480
      %v1067 = vpop.f32.mrb[0].mxu0
      %v1068 = vadd.f32 0.0, %v1067
      %v1069 = vpop.f32.mrb[0].mxu0
      %1070 = vmatprep.mubr.f32.mxu0 0.0
      %1071 = vmatmul.mubr.f32.gmra.mrb[0].mxu0 %v483
      %v1072 = vpop.f32.mrb[0].mxu0
      %v1073 = vadd.f32 0.0, %v1072
      %v1074 = vpop.f32.mrb[0].mxu0
      %1075 = vmatprep.mubr.f32.mxu0 0.0
      %1076 = vmatmul.mubr.f32.gmra.mrb[0].mxu0 %v486
      %v1077 = vpop.f32.mrb[0].mxu0
      %v1078 = vadd.f32 0.0, %v1077
      %v1079 = vpop.f32.mrb[0].mxu0
      %1080 = vmatprep.mubr.f32.mxu0 0.0
      %1081 = vmatmul.mubr.f32.gmra.mrb[0].mxu0 %v489
      %v1082 = vpop.f32.mrb[0].mxu0
      %v1083 = vadd.f32 0.0, %v1082
      %v1084 = vpop.f32.mrb[0].mxu0
      %1085 = vmatprep.mubr.f32.mxu0 0.0
      %1086 = vmatmul.mubr.f32.gmra.mrb[0].mxu0 %v492
      %v1087 = vpop.f32.mrb[0].mxu0
      %v1088 = vadd.f32 0.0, %v1087
      %v1089 = vpop.f32.mrb[0].mxu0
      %1090 = vmatprep.mubr.f32.mxu0 0.0
      %1091 = vmatmul.mubr.f32.gmra.mrb[0].mxu0 %v495
      %v1092 = vpop.f32.mrb[0].mxu0
      %v1093 = vadd.f32 0.0, %v1092
      %v1094 = vpop.f32.mrb[0].mxu0
      %1095 = vmatprep.mubr.f32.mxu0 0.0
      %1096 = vmatmul.mubr.f32.gmra.mrb[0].mxu0 %v498
      %v1097 = vpop.f32.mrb[0].mxu0
      %v1098 = vadd.f32 0.0, %v1097
      %v1099 = vpop.f32.mrb[0].mxu0
      %1100 = vmatprep.mubr.f32.mxu0 0.0
      %1101 = vmatmul.mubr.f32.gmra.mrb[0].mxu0 %v501
      %v1102 = vpop.f32.mrb[0].mxu0
      %v1103 = vadd.f32 0.0, %v1102
      %v1104 = vpop.f32.mrb[0].mxu0
      %1105 = vmatprep.mubr.f32.mxu0 0.0
      %1106 = vmatmul.mubr.f32.gmra.mrb[0].mxu0 %v504
      %v1107 = vpop.f32.mrb[0].mxu0
      %v1108 = vadd.f32 0.0, %v1107
      %v1109 = vpop.f32.mrb[0].mxu0
      %1110 = vmatprep.mubr.f32.mxu0 0.0
      %1111 = vmatmul.mubr.f32.gmra.mrb[0].mxu0 %v507
      %v1112 = vpop.f32.mrb[0].mxu0
      %v1113 = vadd.f32 0.0, %v1112
      %v1114 = vpop.f32.mrb[0].mxu0
      %1115 = vmatprep.mubr.f32.mxu0 0.0
      %1116 = vmatmul.mubr.f32.gmra.mrb[0].mxu0 %v510
      %v1117 = vpop.f32.mrb[0].mxu0
      %v1118 = vadd.f32 0.0, %v1117
      %v1119 = vpop.f32.mrb[0].mxu0
      %1120 = vmatprep.mubr.f32.mxu0 0.0
      %1121 = vmatmul.mubr.f32.gmra.mrb[0].mxu0 %v513
      %v1122 = vpop.f32.mrb[0].mxu0
      %v1123 = vadd.f32 0.0, %v1122
      %v1124 = vpop.f32.mrb[0].mxu0
      %1125 = vmatprep.mubr.f32.mxu0 0.0
      %1126 = vmatmul.mubr.f32.gmra.mrb[0].mxu0 %v516
      %v1127 = vpop.f32.mrb[0].mxu0
      %v1128 = vadd.f32 0.0, %v1127
      %v1129 = vpop.f32.mrb[0].mxu0
      %1130 = vmatprep.mubr.f32.mxu0 0.0
      %1131 = vmatmul.mubr.f32.gmra.mrb[0].mxu0 %v519
      %v1132 = vpop.f32.mrb[0].mxu0
      %v1133 = vadd.f32 0.0, %v1132
      %v1134 = vpop.f32.mrb[0].mxu0
      %1135 = vmatprep.mubr.f32.mxu0 0.0
      %1136 = vmatmul.mubr.f32.gmra.mrb[0].mxu0 %v522
      %v1137 = vpop.f32.mrb[0].mxu0
      %v1138 = vadd.f32 0.0, %v1137
      %v1139 = vpop.f32.mrb[0].mxu0
      %1140 = vmatprep.mubr.f32.mxu0 0.0
      %1141 = vmatmul.mubr.f32.gmra.mrb[0].mxu0 %v525
      %v1142 = vpop.f32.mrb[0].mxu0
      %v1143 = vadd.f32 0.0, %v1142
      %v1144 = vpop.f32.mrb[0].mxu0
      %1145 = vmatprep.mubr.f32.mxu0 0.0
      %1146 = vmatmul.mubr.f32.gmra.mrb[0].mxu0 %v528
      %v1147 = vpop.f32.mrb[0].mxu0
      %v1148 = vadd.f32 0.0, %v1147
      %v1149 = vpop.f32.mrb[0].mxu0
      %1150 = vmatprep.mubr.f32.mxu0 0.0
      %1151 = vmatmul.mubr.f32.gmra.mrb[0].mxu0 %v531
      %v1152 = vpop.f32.mrb[0].mxu0
      %v1153 = vadd.f32 0.0, %v1152
      %v1154 = vpop.f32.mrb[0].mxu0
      %1155 = vmatprep.mubr.f32.mxu0 0.0
      %1156 = vmatmul.mubr.f32.gmra.mrb[0].mxu0 %v534
      %v1157 = vpop.f32.mrb[0].mxu0
      %v1158 = vadd.f32 0.0, %v1157
      %v1159 = vpop.f32.mrb[0].mxu0
      %1160 = vmatprep.mubr.f32.mxu0 0.0
      %1161 = vmatmul.mubr.f32.gmra.mrb[0].mxu0 %v537
      %v1162 = vpop.f32.mrb[0].mxu0
      %v1163 = vadd.f32 0.0, %v1162
      %v1164 = vpop.f32.mrb[0].mxu0
      %1165 = vmatprep.mubr.f32.mxu0 0.0
      %1166 = vmatmul.mubr.f32.gmra.mrb[0].mxu0 %v540
      %v1167 = vpop.f32.mrb[0].mxu0
      %v1168 = vadd.f32 0.0, %v1167
      %v1169 = vpop.f32.mrb[0].mxu0
      %1170 = vmatprep.mubr.f32.mxu0 0.0
      %1171 = vmatmul.mubr.f32.gmra.mrb[0].mxu0 %v543
      %v1172 = vpop.f32.mrb[0].mxu0
      %v1173 = vadd.f32 0.0, %v1172
      %v1174 = vpop.f32.mrb[0].mxu0
      %1175 = vmatprep.mubr.f32.mxu0 0.0
      %1176 = vmatmul.mubr.f32.gmra.mrb[0].mxu0 %v546
      %v1177 = vpop.f32.mrb[0].mxu0
      %v1178 = vadd.f32 0.0, %v1177
      %v1179 = vpop.f32.mrb[0].mxu0
      %1180 = vmatprep.mubr.f32.mxu0 0.0
      %1181 = vmatmul.mubr.f32.gmra.mrb[0].mxu0 %v549
      %v1182 = vpop.f32.mrb[0].mxu0
      %v1183 = vadd.f32 0.0, %v1182
      %v1184 = vpop.f32.mrb[0].mxu0
      %1185 = vmatprep.mubr.f32.mxu0 0.0
      %1186 = vmatmul.mubr.f32.gmra.mrb[0].mxu0 %v552
      %v1187 = vpop.f32.mrb[0].mxu0
      %v1188 = vadd.f32 0.0, %v1187
      %v1189 = vpop.f32.mrb[0].mxu0
      %1190 = vmatprep.mubr.f32.mxu0 0.0
      %1191 = vmatmul.mubr.f32.gmra.mrb[0].mxu0 %v555
      %v1192 = vpop.f32.mrb[0].mxu0
      %v1193 = vadd.f32 0.0, %v1192
      %v1194 = vpop.f32.mrb[0].mxu0
      %1195 = vmatprep.mubr.f32.mxu0 0.0
      %1196 = vmatmul.mubr.f32.gmra.mrb[0].mxu0 %v558
      %v1197 = vpop.f32.mrb[0].mxu0
      %v1198 = vadd.f32 0.0, %v1197
      %v1199 = vpop.f32.mrb[0].mxu0
      %1200 = vmatprep.mubr.f32.mxu0 0.0
      %1201 = vmatmul.mubr.f32.gmra.mrb[0].mxu0 %v561
      %v1202 = vpop.f32.mrb[0].mxu0
      %v1203 = vadd.f32 0.0, %v1202
      %v1204 = vpop.f32.mrb[0].mxu0
      %1205 = vmatprep.mubr.f32.mxu0 0.0
      %1206 = vmatmul.mubr.f32.gmra.mrb[0].mxu0 %v564
      %v1207 = vpop.f32.mrb[0].mxu0
      %v1208 = vadd.f32 0.0, %v1207
      %v1209 = vpop.f32.mrb[0].mxu0
      %1210 = vmatprep.mubr.f32.mxu0 0.0
      %1211 = vmatmul.mubr.f32.gmra.mrb[0].mxu0 %v567
      %v1212 = vpop.f32.mrb[0].mxu0
      %v1213 = vadd.f32 0.0, %v1212
      %v1214 = vpop.f32.mrb[0].mxu0
      %1215 = vmatprep.mubr.f32.mxu0 0.0
      %1216 = vmatmul.mubr.f32.gmra.mrb[0].mxu0 %v570
      %v1217 = vpop.f32.mrb[0].mxu0
      %v1218 = vadd.f32 0.0, %v1217
      %v1219 = vpop.f32.mrb[0].mxu0
      %1220 = vmatprep.mubr.f32.mxu0 0.0
      %1221 = vmatmul.mubr.f32.gmra.mrb[0].mxu0 %v573
      %v1222 = vpop.f32.mrb[0].mxu0
      %v1223 = vadd.f32 0.0, %v1222
      %v1224 = vpop.f32.mrb[0].mxu0
      %1225 = vmatprep.mubr.f32.mxu0 0.0
      %1226 = vmatmul.mubr.f32.gmra.mrb[0].mxu0 %v576
      %v1227 = vpop.f32.mrb[0].mxu0
      %v1228 = vadd.f32 0.0, %v1227
      %v1229 = vpop.f32.mrb[0].mxu0
      %1230 = vmatprep.mubr.f32.mxu0 0.0
      %1231 = vmatmul.mubr.f32.gmra.mrb[0].mxu0 %v579
      %v1232 = vpop.f32.mrb[0].mxu0
      %v1233 = vadd.f32 0.0, %v1232
      %v1234 = vpop.f32.mrb[0].mxu0
      %1235 = vmatprep.mubr.f32.mxu0 0.0
      %1236 = vmatmul.mubr.f32.gmra.mrb[0].mxu0 %v582
      %v1237 = vpop.f32.mrb[0].mxu0
      %v1238 = vadd.f32 0.0, %v1237
      %v1239 = vpop.f32.mrb[0].mxu0
      %1240 = vmatprep.mubr.f32.mxu0 0.0
      %1241 = vmatmul.mubr.f32.gmra.mrb[0].mxu0 %v585
      %v1242 = vpop.f32.mrb[0].mxu0
      %v1243 = vadd.f32 0.0, %v1242
      %v1244 = vpop.f32.mrb[0].mxu0
      %1245 = vmatprep.mubr.f32.mxu0 0.0
      %1246 = vmatmul.mubr.f32.gmra.mrb[0].mxu0 %v588
      %v1247 = vpop.f32.mrb[0].mxu0
      %v1248 = vadd.f32 0.0, %v1247
      %v1249 = vpop.f32.mrb[0].mxu0
      %1250 = vmatprep.mubr.f32.mxu0 0.0
      %1251 = vmatmul.mubr.f32.gmra.mrb[0].mxu0 %v591
      %v1252 = vpop.f32.mrb[0].mxu0
      %v1253 = vadd.f32 0.0, %v1252
      %v1254 = vpop.f32.mrb[0].mxu0
      %1255 = vmatprep.mubr.f32.mxu0 0.0
      %1256 = vmatmul.mubr.f32.gmra.mrb[0].mxu0 %v594
      %v1257 = vpop.f32.mrb[0].mxu0
      %v1258 = vadd.f32 0.0, %v1257
      %v1259 = vpop.f32.mrb[0].mxu0
      %1260 = vmatprep.mubr.f32.mxu0 0.0
      %1261 = vmatmul.mubr.f32.gmra.mrb[0].mxu0 %v597
      %v1262 = vpop.f32.mrb[0].mxu0
      %v1263 = vadd.f32 0.0, %v1262
      %v1264 = vpop.f32.mrb[0].mxu0
      %1265 = vmatprep.mubr.f32.mxu0 0.0
      %1266 = vmatmul.mubr.f32.gmra.mrb[0].mxu0 %v600
      %v1267 = vpop.f32.mrb[0].mxu0
      %v1268 = vadd.f32 0.0, %v1267
      %v1269 = vpop.f32.mrb[0].mxu0
      %1270 = vmatprep.mubr.f32.mxu0 0.0
      %1271 = vmatmul.mubr.f32.gmra.mrb[0].mxu0 %v603
      %v1272 = vpop.f32.mrb[0].mxu0
      %v1273 = vadd.f32 0.0, %v1272
      %v1274 = vpop.f32.mrb[0].mxu0
      %1275 = vmatprep.mubr.f32.mxu0 0.0
      %1276 = vmatmul.mubr.f32.gmra.mrb[0].mxu0 %v606
      %v1277 = vpop.f32.mrb[0].mxu0
      %v1278 = vadd.f32 0.0, %v1277
      %v1279 = vpop.f32.mrb[0].mxu0
      %1280 = vmatprep.mubr.f32.mxu0 0.0
      %1281 = vmatmul.mubr.f32.gmra.mrb[0].mxu0 %v609
      %v1282 = vpop.f32.mrb[0].mxu0
      %v1283 = vadd.f32 0.0, %v1282
      %v1284 = vpop.f32.mrb[0].mxu0
      %1285 = vmatprep.mubr.f32.mxu0 0.0
      %1286 = vmatmul.mubr.f32.gmra.mrb[0].mxu0 %v612
      %v1287 = vpop.f32.mrb[0].mxu0
      %v1288 = vadd.f32 0.0, %v1287
      %v1289 = vpop.f32.mrb[0].mxu0
      %1290 = vmatprep.mubr.f32.mxu0 0.0
      %1291 = vmatmul.mubr.f32.gmra.mrb[0].mxu0 %v615
      %v1292 = vpop.f32.mrb[0].mxu0
      %v1293 = vadd.f32 0.0, %v1292
      %v1294 = vpop.f32.mrb[0].mxu0
      %1295 = vmatprep.mubr.f32.mxu0 0.0
      %1296 = vmatmul.mubr.f32.gmra.mrb[0].mxu0 %v618
      %v1297 = vpop.f32.mrb[0].mxu0
      %v1298 = vadd.f32 0.0, %v1297
      %v1299 = vpop.f32.mrb[0].mxu0
      %1300 = vmatprep.mubr.f32.mxu0 0.0
      %1301 = vmatmul.mubr.f32.gmra.mrb[0].mxu0 %v621
      %v1302 = vpop.f32.mrb[0].mxu0
      %v1303 = vadd.f32 0.0, %v1302
      %v1304 = vpop.f32.mrb[0].mxu0
      %1305 = vmatprep.mubr.f32.mxu0 0.0
      %1306 = vmatmul.mubr.f32.gmra.mrb[0].mxu0 %v624
      %v1307 = vpop.f32.mrb[0].mxu0
      %v1308 = vadd.f32 0.0, %v1307
      %v1309 = vpop.f32.mrb[0].mxu0
      %1310 = vmatprep.mubr.f32.mxu0 0.0
      %1311 = vmatmul.mubr.f32.gmra.mrb[0].mxu0 %v627
      %v1312 = vpop.f32.mrb[0].mxu0
      %v1313 = vadd.f32 0.0, %v1312
      %v1314 = vpop.f32.mrb[0].mxu0
      %1315 = vmatprep.mubr.f32.mxu0 0.0
      %1316 = vmatmul.mubr.f32.gmra.mrb[0].mxu0 %v630
      %v1317 = vpop.f32.mrb[0].mxu0
      %v1318 = vadd.f32 0.0, %v1317
      %v1319 = vpop.f32.mrb[0].mxu0
      %1320 = vmatprep.mubr.f32.mxu0 0.0
      %1321 = vmatmul.mubr.f32.gmra.mrb[0].mxu0 %v633
      %v1322 = vpop.f32.mrb[0].mxu0
      %v1323 = vadd.f32 0.0, %v1322
      %v1324 = vpop.f32.mrb[0].mxu0
      %1325 = vmatprep.mubr.f32.mxu0 0.0
      %1326 = vmatmul.mubr.f32.gmra.mrb[0].mxu0 %v636
      %v1327 = vpop.f32.mrb[0].mxu0
      %v1328 = vadd.f32 0.0, %v1327
      %v1329 = vpop.f32.mrb[0].mxu0
      %1330 = vmatprep.mubr.f32.mxu0 0.0
      %1331 = vmatmul.mubr.f32.gmra.mrb[0].mxu0 %v639
      %v1332 = vpop.f32.mrb[0].mxu0
      %v1333 = vadd.f32 0.0, %v1332
      %v1334 = vpop.f32.mrb[0].mxu0
      %1335 = vmatprep.mubr.f32.mxu0 0.0
      %1336 = vmatmul.mubr.f32.gmra.mrb[0].mxu0 %v642
      %v1337 = vpop.f32.mrb[0].mxu0
      %v1338 = vadd.f32 0.0, %v1337
      %v1339 = vpop.f32.mrb[0].mxu0
      %1340 = vmatprep.mubr.f32.mxu0 0.0
      %1341 = vmatmul.mubr.f32.gmra.mrb[0].mxu0 %v645
      %v1342 = vpop.f32.mrb[0].mxu0
      %v1343 = vadd.f32 0.0, %v1342
      %v1344 = vpop.f32.mrb[0].mxu0
      %1345 = vmatprep.mubr.f32.mxu0 0.0
      %1346 = vmatmul.mubr.f32.gmra.mrb[0].mxu0 %v648
      %v1347 = vpop.f32.mrb[0].mxu0
      %v1348 = vadd.f32 0.0, %v1347
      %v1349 = vpop.f32.mrb[0].mxu0
      %1350 = vmatprep.mubr.f32.mxu0 0.0
      %1351 = vmatmul.mubr.f32.gmra.mrb[0].mxu0 %v651
      %v1352 = vpop.f32.mrb[0].mxu0
      %v1353 = vadd.f32 0.0, %v1352
      %v1354 = vpop.f32.mrb[0].mxu0
      %1355 = vmatprep.mubr.f32.mxu0 0.0
      %1356 = vmatmul.mubr.f32.gmra.mrb[0].mxu0 %v654
      %v1357 = vpop.f32.mrb[0].mxu0
      %v1358 = vadd.f32 0.0, %v1357
      %v1359 = vpop.f32.mrb[0].mxu0
      %1360 = vmatprep.mubr.f32.mxu0 0.0
      %1361 = vmatmul.mubr.f32.gmra.mrb[0].mxu0 %v657
      %v1362 = vpop.f32.mrb[0].mxu0
      %v1363 = vadd.f32 0.0, %v1362
      %v1364 = vpop.f32.mrb[0].mxu0
      %1365 = vmatprep.mubr.f32.mxu0 0.0
      %1366 = vmatmul.mubr.f32.gmra.mrb[0].mxu0 %v660
      %v1367 = vpop.f32.mrb[0].mxu0
      %v1368 = vadd.f32 0.0, %v1367
      %v1369 = vpop.f32.mrb[0].mxu0
      %1370 = vdwg.mxu0
      %1371 = vst.msk [vmem:[%s145] sm:$0xff] %vm277, %v733
      %1372 = vst.msk [vmem:[%s145 + $0x8] sm:$0xff] %vm277, %v738
      %1373 = vst.msk [vmem:[%s145 + $0x10] sm:$0xff] %vm277, %v743
      %1374 = vst.msk [vmem:[%s145 + $0x18] sm:$0xff] %vm277, %v748
      %1375 = vst.msk [vmem:[%s145 + $0x20] sm:$0xff] %vm277, %v753
      %1376 = vst.msk [vmem:[%s145 + $0x28] sm:$0xff] %vm277, %v758
      %1377 = vst.msk [vmem:[%s145 + $0x30] sm:$0xff] %vm277, %v763
      %1378 = vst.msk [vmem:[%s145 + $0x38] sm:$0xff] %vm277, %v768
      %1379 = vst.msk [vmem:[%s145 + $0x40] sm:$0xff] %vm277, %v773
      %1380 = vst.msk [vmem:[%s145 + $0x48] sm:$0xff] %vm277, %v778
      %1381 = vst.msk [vmem:[%s145 + $0x50] sm:$0xff] %vm277, %v783
      %1382 = vst.msk [vmem:[%s145 + $0x58] sm:$0xff] %vm277, %v788
      %1383 = vst.msk [vmem:[%s145 + $0x60] sm:$0xff] %vm277, %v793
      %1384 = vst.msk [vmem:[%s145 + $0x68] sm:$0xff] %vm277, %v798
      %1385 = vst.msk [vmem:[%s145 + $0x70] sm:$0xff] %vm277, %v803
      %1386 = vst.msk [vmem:[%s145 + $0x78] sm:$0xff] %vm277, %v808
      %1387 = vst.msk [vmem:[%s145 + $0x80] sm:$0xff] %vm277, %v813
      %1388 = vst.msk [vmem:[%s145 + $0x88] sm:$0xff] %vm277, %v818
      %1389 = vst.msk [vmem:[%s145 + $0x90] sm:$0xff] %vm277, %v823
      %1390 = vst.msk [vmem:[%s145 + $0x98] sm:$0xff] %vm277, %v828
      %1391 = vst.msk [vmem:[%s145 + $0xa0] sm:$0xff] %vm277, %v833
      %1392 = vst.msk [vmem:[%s145 + $0xa8] sm:$0xff] %vm277, %v838
      %1393 = vst.msk [vmem:[%s145 + $0xb0] sm:$0xff] %vm277, %v843
      %1394 = vst.msk [vmem:[%s145 + $0xb8] sm:$0xff] %vm277, %v848
      %1395 = vst.msk [vmem:[%s145 + $0xc0] sm:$0xff] %vm277, %v853
      %1396 = vst.msk [vmem:[%s145 + $0xc8] sm:$0xff] %vm277, %v858
      %1397 = vst.msk [vmem:[%s145 + $0xd0] sm:$0xff] %vm277, %v863
      %1398 = vst.msk [vmem:[%s145 + $0xd8] sm:$0xff] %vm277, %v868
      %1399 = vst.msk [vmem:[%s145 + $0xe0] sm:$0xff] %vm277, %v873
      %1400 = vst.msk [vmem:[%s145 + $0xe8] sm:$0xff] %vm277, %v878
      %1401 = vst.msk [vmem:[%s145 + $0xf0] sm:$0xff] %vm277, %v883
      %1402 = vst.msk [vmem:[%s145 + $0xf8] sm:$0xff] %vm277, %v888
      %1403 = vst.msk [vmem:[%s145 + $0x100] sm:$0xff] %vm277, %v893
      %1404 = vst.msk [vmem:[%s145 + $0x108] sm:$0xff] %vm277, %v898
      %1405 = vst.msk [vmem:[%s145 + $0x110] sm:$0xff] %vm277, %v903
      %1406 = vst.msk [vmem:[%s145 + $0x118] sm:$0xff] %vm277, %v908
      %1407 = vst.msk [vmem:[%s145 + $0x120] sm:$0xff] %vm277, %v913
      %1408 = vst.msk [vmem:[%s145 + $0x128] sm:$0xff] %vm277, %v918
      %1409 = vst.msk [vmem:[%s145 + $0x130] sm:$0xff] %vm277, %v923
      %1410 = vst.msk [vmem:[%s145 + $0x138] sm:$0xff] %vm277, %v928
      %1411 = vst.msk [vmem:[%s145 + $0x140] sm:$0xff] %vm277, %v933
      %1412 = vst.msk [vmem:[%s145 + $0x148] sm:$0xff] %vm277, %v938
      %1413 = vst.msk [vmem:[%s145 + $0x150] sm:$0xff] %vm277, %v943
      %1414 = vst.msk [vmem:[%s145 + $0x158] sm:$0xff] %vm277, %v948
      %1415 = vst.msk [vmem:[%s145 + $0x160] sm:$0xff] %vm277, %v953
      %1416 = vst.msk [vmem:[%s145 + $0x168] sm:$0xff] %vm277, %v958
      %1417 = vst.msk [vmem:[%s145 + $0x170] sm:$0xff] %vm277, %v963
      %1418 = vst.msk [vmem:[%s145 + $0x178] sm:$0xff] %vm277, %v968
      %1419 = vst.msk [vmem:[%s145 + $0x180] sm:$0xff] %vm277, %v973
      %1420 = vst.msk [vmem:[%s145 + $0x188] sm:$0xff] %vm277, %v978
      %1421 = vst.msk [vmem:[%s145 + $0x190] sm:$0xff] %vm277, %v983
      %1422 = vst.msk [vmem:[%s145 + $0x198] sm:$0xff] %vm277, %v988
      %1423 = vst.msk [vmem:[%s145 + $0x1a0] sm:$0xff] %vm277, %v993
      %1424 = vst.msk [vmem:[%s145 + $0x1a8] sm:$0xff] %vm277, %v998
      %1425 = vst.msk [vmem:[%s145 + $0x1b0] sm:$0xff] %vm277, %v1003
      %1426 = vst.msk [vmem:[%s145 + $0x1b8] sm:$0xff] %vm277, %v1008
      %1427 = vst.msk [vmem:[%s145 + $0x1c0] sm:$0xff] %vm277, %v1013
      %1428 = vst.msk [vmem:[%s145 + $0x1c8] sm:$0xff] %vm277, %v1018
      %1429 = vst.msk [vmem:[%s145 + $0x1d0] sm:$0xff] %vm277, %v1023
      %1430 = vst.msk [vmem:[%s145 + $0x1d8] sm:$0xff] %vm277, %v1028
      %1431 = vst.msk [vmem:[%s145 + $0x1e0] sm:$0xff] %vm277, %v1033
      %1432 = vst.msk [vmem:[%s145 + $0x1e8] sm:$0xff] %vm277, %v1038
      %1433 = vst.msk [vmem:[%s145 + $0x1f0] sm:$0xff] %vm277, %v1043
      %1434 = vst.msk [vmem:[%s145 + $0x1f8] sm:$0xff] %vm277, %v1048
      %1435 = vst.msk [vmem:[%s145 + $0x200] sm:$0xff] %vm277, %v1053
      %1436 = vst.msk [vmem:[%s145 + $0x208] sm:$0xff] %vm277, %v1058
      %1437 = vst.msk [vmem:[%s145 + $0x210] sm:$0xff] %vm277, %v1063
      %1438 = vst.msk [vmem:[%s145 + $0x218] sm:$0xff] %vm277, %v1068
      %1439 = vst.msk [vmem:[%s145 + $0x220] sm:$0xff] %vm277, %v1073
      %1440 = vst.msk [vmem:[%s145 + $0x228] sm:$0xff] %vm277, %v1078
      %1441 = vst.msk [vmem:[%s145 + $0x230] sm:$0xff] %vm277, %v1083
      %1442 = vst.msk [vmem:[%s145 + $0x238] sm:$0xff] %vm277, %v1088
      %1443 = vst.msk [vmem:[%s145 + $0x240] sm:$0xff] %vm277, %v1093
      %1444 = vst.msk [vmem:[%s145 + $0x248] sm:$0xff] %vm277, %v1098
      %1445 = vst.msk [vmem:[%s145 + $0x250] sm:$0xff] %vm277, %v1103
      %1446 = vst.msk [vmem:[%s145 + $0x258] sm:$0xff] %vm277, %v1108
      %1447 = vst.msk [vmem:[%s145 + $0x260] sm:$0xff] %vm277, %v1113
      %1448 = vst.msk [vmem:[%s145 + $0x268] sm:$0xff] %vm277, %v1118
      %1449 = vst.msk [vmem:[%s145 + $0x270] sm:$0xff] %vm277, %v1123
      %1450 = vst.msk [vmem:[%s145 + $0x278] sm:$0xff] %vm277, %v1128
      %1451 = vst.msk [vmem:[%s145 + $0x280] sm:$0xff] %vm277, %v1133
      %1452 = vst.msk [vmem:[%s145 + $0x288] sm:$0xff] %vm277, %v1138
      %1453 = vst.msk [vmem:[%s145 + $0x290] sm:$0xff] %vm277, %v1143
      %1454 = vst.msk [vmem:[%s145 + $0x298] sm:$0xff] %vm277, %v1148
      %1455 = vst.msk [vmem:[%s145 + $0x2a0] sm:$0xff] %vm277, %v1153
      %1456 = vst.msk [vmem:[%s145 + $0x2a8] sm:$0xff] %vm277, %v1158
      %1457 = vst.msk [vmem:[%s145 + $0x2b0] sm:$0xff] %vm277, %v1163
      %1458 = vst.msk [vmem:[%s145 + $0x2b8] sm:$0xff] %vm277, %v1168
      %1459 = vst.msk [vmem:[%s145 + $0x2c0] sm:$0xff] %vm277, %v1173
      %1460 = vst.msk [vmem:[%s145 + $0x2c8] sm:$0xff] %vm277, %v1178
      %1461 = vst.msk [vmem:[%s145 + $0x2d0] sm:$0xff] %vm277, %v1183
      %1462 = vst.msk [vmem:[%s145 + $0x2d8] sm:$0xff] %vm277, %v1188
      %1463 = vst.msk [vmem:[%s145 + $0x2e0] sm:$0xff] %vm277, %v1193
      %1464 = vst.msk [vmem:[%s145 + $0x2e8] sm:$0xff] %vm277, %v1198
      %1465 = vst.msk [vmem:[%s145 + $0x2f0] sm:$0xff] %vm277, %v1203
      %1466 = vst.msk [vmem:[%s145 + $0x2f8] sm:$0xff] %vm277, %v1208
      %1467 = vst.msk [vmem:[%s145 + $0x300] sm:$0xff] %vm277, %v1213
      %1468 = vst.msk [vmem:[%s145 + $0x308] sm:$0xff] %vm277, %v1218
      %1469 = vst.msk [vmem:[%s145 + $0x310] sm:$0xff] %vm277, %v1223
      %1470 = vst.msk [vmem:[%s145 + $0x318] sm:$0xff] %vm277, %v1228
      %1471 = vst.msk [vmem:[%s145 + $0x320] sm:$0xff] %vm277, %v1233
      %1472 = vst.msk [vmem:[%s145 + $0x328] sm:$0xff] %vm277, %v1238
      %1473 = vst.msk [vmem:[%s145 + $0x330] sm:$0xff] %vm277, %v1243
      %1474 = vst.msk [vmem:[%s145 + $0x338] sm:$0xff] %vm277, %v1248
      %1475 = vst.msk [vmem:[%s145 + $0x340] sm:$0xff] %vm277, %v1253
      %1476 = vst.msk [vmem:[%s145 + $0x348] sm:$0xff] %vm277, %v1258
      %1477 = vst.msk [vmem:[%s145 + $0x350] sm:$0xff] %vm277, %v1263
      %1478 = vst.msk [vmem:[%s145 + $0x358] sm:$0xff] %vm277, %v1268
      %1479 = vst.msk [vmem:[%s145 + $0x360] sm:$0xff] %vm277, %v1273
      %1480 = vst.msk [vmem:[%s145 + $0x368] sm:$0xff] %vm277, %v1278
      %1481 = vst.msk [vmem:[%s145 + $0x370] sm:$0xff] %vm277, %v1283
      %1482 = vst.msk [vmem:[%s145 + $0x378] sm:$0xff] %vm277, %v1288
      %1483 = vst.msk [vmem:[%s145 + $0x380] sm:$0xff] %vm277, %v1293
      %1484 = vst.msk [vmem:[%s145 + $0x388] sm:$0xff] %vm277, %v1298
      %1485 = vst.msk [vmem:[%s145 + $0x390] sm:$0xff] %vm277, %v1303
      %1486 = vst.msk [vmem:[%s145 + $0x398] sm:$0xff] %vm277, %v1308
      %1487 = vst.msk [vmem:[%s145 + $0x3a0] sm:$0xff] %vm277, %v1313
      %1488 = vst.msk [vmem:[%s145 + $0x3a8] sm:$0xff] %vm277, %v1318
      %1489 = vst.msk [vmem:[%s145 + $0x3b0] sm:$0xff] %vm277, %v1323
      %1490 = vst.msk [vmem:[%s145 + $0x3b8] sm:$0xff] %vm277, %v1328
      %1491 = vst.msk [vmem:[%s145 + $0x3c0] sm:$0xff] %vm277, %v1333
      %1492 = vst.msk [vmem:[%s145 + $0x3c8] sm:$0xff] %vm277, %v1338
      %1493 = vst.msk [vmem:[%s145 + $0x3d0] sm:$0xff] %vm277, %v1343
      %1494 = vst.msk [vmem:[%s145 + $0x3d8] sm:$0xff] %vm277, %v1348
      %1495 = vst.msk [vmem:[%s145 + $0x3e0] sm:$0xff] %vm277, %v1353
      %1496 = vst.msk [vmem:[%s145 + $0x3e8] sm:$0xff] %vm277, %v1358
      %1497 = vst.msk [vmem:[%s145 + $0x3f0] sm:$0xff] %vm277, %v1363
      %1498 = vst.msk [vmem:[%s145 + $0x3f8] sm:$0xff] %vm277, %v1368
      %s1499 = smul.u32 128, %s13
      %p1500 = scmp.lt.s32.totalorder %s1499, 255
      %s1501 = scalar_select %p1500, %s1499, 255
      %s1502 = smul.addr %s1501, 8
      %s1503 = scalar_lea.vmem %s2, %s1502
      // Predicated region
      $region29: #{tpu_custom_call.1} parent=27 // pred_check
        %p1504 = pneg %p78
      $region30: #{tpu_custom_call.1} parent=27 // pred_check_branch
        %1506 = sbr.rel (%p1504) target = $region32
      $region31: #{tpu_custom_call.1} parent=27 // pred_region
        %s1507 = smul.u32 128, %s13
      $region32: #{tpu_custom_call.1} parent=27 // pred_fallthru
        _
    $region28: #{tpu_custom_call.1} parent=5 // pred_fallthru
      _
    %p1508 = scmp.le.s32.totalorder 2, %s8
    // Predicated region
    $region33: #{tpu_custom_call.1} parent=5 // pred_check
      %p1509 = pneg %p1508
    $region34: #{tpu_custom_call.1} parent=5 // pred_check_branch
      %1511 = sbr.rel (%p1509) target = $region36
    $region35: #{tpu_custom_call.1} parent=5 // pred_region
      %s1512 = ssub.s32 %s8, 2
      // Predicated region
      $region37: #{tpu_custom_call.1} parent=35 // pred_check
        %p1513 = pneg %p84
      $region38: #{tpu_custom_call.1} parent=35 // pred_check_branch
        %1515 = sbr.rel (%p1513) target = $region40
      $region39: #{tpu_custom_call.1} parent=35 // pred_region
        %s1516 = smul.u32 128, %s14
        %p1517 = scmp.lt.s32.totalorder %s1516, 255
        %s1518 = scalar_select %p1517, %s1516, 255
        %s1519 = smul.addr %s1518, 8
        %s1520 = scalar_lea.vmem %s2, %s1519
      $region40: #{tpu_custom_call.1} parent=35 // pred_fallthru
        _
    $region36: #{tpu_custom_call.1} parent=5 // pred_fallthru
      _
  $region6: #{tpu_custom_call.1} parent=0 // loop_footer
    %s12 = sadd.s32 1, %s8
  $region7: #{tpu_custom_call.1} parent=0 // loop_footer_branch
    %7 = sbr.rel target = $region3
  $region8: #{tpu_custom_call.1} parent=0 // loop_exit
    _

</llo_original>
